<compile_context>
chip_gen: v5e
topology: v5e:2x2
jax: 0.10.0
libtpu: 0.0.40
codegen_flags: <defaults>
</compile_context>

<pallas_src>
import jax
import jax.numpy as jnp
from jax.experimental import pallas as pl
from jax.experimental.pallas import tpu as pltpu


def _round_up(x, m):
    return (x + m - 1) // m * m


def _ffm_kernel(g_ref, l_ref,
                w1g_ref, w1l_ref, b1_ref,
                w2_ref, b2_ref,
                w3l_ref, w3g_ref, b3_ref,
                w4_ref, b4_ref,
                out_ref):
    """Whole FeatureFusionModule forward for one tile of rows.

    g_ref : (tm, G)    global-features tile (unpadded feature dim)
    l_ref : (tm, L)    local-features tile
    w1g/w1l : (G, L)/(L, L)   flow_field_generator[0], split by concat half
    b1      : (1, L)
    w2/b2   : (L, L)/(1, L)   flow_field_generator[2]
    w3l/w3g : (L, Np)/(G, Np) output_network[0], split by concat half
                              (output columns zero-padded to Np)
    b3      : (1, Np)
    w4/b4   : (Np, Np)/(1, Np) output_network[2] (zero-padded)
    out     : (tm, Np)        columns >= L+G are zero; sliced off by wrapper
    """
    wd = w1g_ref.dtype                      # matmul operand dtype (bf16)
    g = g_ref[...].astype(wd)
    l_f32 = l_ref[...].astype(jnp.float32)
    l = l_ref[...].astype(wd)

    # flow_field_generator: Linear(cat[g, l]) -> ReLU -> Linear, concat-free:
    #   cat([g, l]) @ W1 == g @ W1[:G] + l @ W1[G:]
    h1 = jnp.dot(g, w1g_ref[...], preferred_element_type=jnp.float32)
    h1 = h1 + jnp.dot(l, w1l_ref[...], preferred_element_type=jnp.float32)
    h1 = jnp.maximum(h1 + b1_ref[...], 0.0)
    flow = jnp.dot(h1.astype(wd), w2_ref[...],
                   preferred_element_type=jnp.float32) + b2_ref[...]

    # refined local features (f32)
    refined = l_f32 + flow

    # output_network: Linear(cat[refined, g]) -> ReLU -> Linear, concat-free:
    #   cat([refined, g]) @ W3 == refined @ W3[:L] + g @ W3[L:]
    h2 = jnp.dot(refined.astype(wd), w3l_ref[...],
                 preferred_element_type=jnp.float32)
    h2 = h2 + jnp.dot(g, w3g_ref[...], preferred_element_type=jnp.float32)
    h2 = jnp.maximum(h2 + b3_ref[...], 0.0)
    out = jnp.dot(h2.astype(wd), w4_ref[...],
                  preferred_element_type=jnp.float32) + b4_ref[...]

    out_ref[...] = out.astype(out_ref.dtype)


def prepare_params(params, global_dim, local_dim, weight_dtype=jnp.bfloat16):
    """Split the concat-facing weights; pad only output-facing dims to 128.

    Input params are nn.Linear-shaped but pre-transposed to (in, out), biases
    (1, out). Weights are cast to `weight_dtype` (bf16) for the MXU; biases
    stay f32. Returns the 10 arrays consumed by the kernel.
    """
    w1, b1, w2, b2, w3, b3, w4, b4 = params
    G, L = global_dim, local_dim
    N = G + L
    Np = _round_up(N, 128)

    def padcols(x, cols):
        return jnp.pad(x, ((0, 0), (0, cols - x.shape[1])))

    def padboth(x, rows, cols):
        return jnp.pad(x, ((0, rows - x.shape[0]), (0, cols - x.shape[1])))

    wd = weight_dtype
    w1g = w1[:G].astype(wd)                       # combined = [global, local]
    w1l = w1[G:].astype(wd)
    b1p = b1.astype(jnp.float32)
    w2p = w2.astype(wd)
    b2p = b2.astype(jnp.float32)
    w3l = padcols(w3[:L], Np).astype(wd)          # final = [refined, global]
    w3g = padcols(w3[L:], Np).astype(wd)
    b3p = padcols(b3, Np).astype(jnp.float32)
    w4p = padboth(w4, Np, Np).astype(wd)
    b4p = padcols(b4, Np).astype(jnp.float32)
    return (w1g, w1l, b1p, w2p, b2p, w3l, w3g, b3p, w4p, b4p)


def feature_fusion_forward(global_features, local_features, params, *,
                           tm=512, weight_dtype=jnp.bfloat16):
    """Pallas implementation of FeatureFusionModule.forward.

    global_features: [..., G], local_features: [..., L]  (same leading dims)
    returns: [..., L + G]
    """
    G = global_features.shape[-1]
    L = local_features.shape[-1]
    lead = global_features.shape[:-1]
    assert local_features.shape[:-1] == lead
    N = L + G
    Np = _round_up(N, 128)

    g2 = global_features.reshape(-1, G)
    l2 = local_features.reshape(-1, L)
    B = g2.shape[0]

    # Row tiling: sublane (8) multiple, shrink for tiny inputs, ragged last
    # tile handled by Pallas masking (no wrapper-side row padding).
    tm = max(8, min(tm, _round_up(B, 8)))
    grid = (pl.cdiv(B, tm),)

    prepped = prepare_params(params, G, L, weight_dtype)

    # --- VMEM budget: single-buffered weights + double-buffered act tiles.
    in_item = jnp.dtype(global_features.dtype).itemsize
    out_item = in_item
    w_item = jnp.dtype(weight_dtype).itemsize
    wgt_bytes = (w_item * (G * L + 2 * L * L + (L + G) * Np + Np * Np)
                 + 4 * (2 * L + 3 * Np))
    act_bytes = 2 * tm * (G + L) * in_item + 2 * tm * Np * out_item
    interm_bytes = 3 * tm * (L + Np) * 4          # rough in-kernel f32 temps
    est = wgt_bytes + act_bytes + interm_bytes + (2 << 20)

    try:
        hw_vmem = pltpu.get_tpu_info().vmem_capacity_bytes
    except Exception:
        hw_vmem = 64 << 20                        # conservative (v7x per-TC)
    cap = max(hw_vmem - (8 << 20), 16 << 20)
    vmem_limit = int(min(max(est, 32 << 20), cap))

    flops = 2 * B * ((G + L) * L + L * L + 2 * (L + G) * (L + G))
    bytes_accessed = B * (G + L) * in_item + B * Np * out_item + wgt_bytes
    cost = pl.CostEstimate(flops=flops, transcendentals=0,
                           bytes_accessed=int(bytes_accessed))

    def resident(shape):
        # Whole-array block, constant index map -> stays resident; single
        # buffer (no point double-buffering something that never changes).
        return pl.BlockSpec(shape, lambda i: (0, 0),
                            pipeline_mode=pl.Buffered(1))

    in_specs = [
        pl.BlockSpec((tm, G), lambda i: (i, 0)),   # global tile
        pl.BlockSpec((tm, L), lambda i: (i, 0)),   # local tile
        resident((G, L)),                          # w1g
        resident((L, L)),                          # w1l
        resident((1, L)),                          # b1
        resident((L, L)),                          # w2
        resident((1, L)),                          # b2
        resident((L, Np)),                         # w3l
        resident((G, Np)),                         # w3g
        resident((1, Np)),                         # b3
        resident((Np, Np)),                        # w4
        resident((1, Np)),                         # b4
    ]

    out = pl.pallas_call(
        _ffm_kernel,
        out_shape=jax.ShapeDtypeStruct((B, Np), global_features.dtype),
        grid_spec=pltpu.PrefetchScalarGridSpec(
            num_scalar_prefetch=0,
            grid=grid,
            in_specs=in_specs,
            out_specs=pl.BlockSpec((tm, Np), lambda i: (i, 0)),
        ),
        compiler_params=pltpu.CompilerParams(
            dimension_semantics=("parallel",),
            vmem_limit_bytes=vmem_limit),
        cost_estimate=cost,
    )(g2, l2, *prepped)

    return out[:, :N].reshape(*lead, N)


def init_params(key, global_dim, local_dim, dtype=jnp.float32):
    """Deterministic synthetic params, matching nn.Linear shapes.

    Weights are stored (in, out) (i.e. PyTorch weight transposed) so the
    kernel computes x @ W + b. Biases are (1, out) for 2-D TPU layout.
    """
    G, L = global_dim, local_dim
    dims = [
        (G + L, L),          # flow_field_generator[0]
        (L, L),              # flow_field_generator[2]
        (L + G, L + G),      # output_network[0]
        (L + G, L + G),      # output_network[2]
    ]
    params = []
    for (fan_in, fan_out) in dims:
        key, kw, kb = jax.random.split(key, 3)
        bound = 1.0 / (fan_in ** 0.5)
        w = jax.random.uniform(kw, (fan_in, fan_out), dtype, -bound, bound)
        b = jax.random.uniform(kb, (1, fan_out), dtype, -bound, bound)
        params.extend([w, b])
    return tuple(params)


def feature_fusion_ref(global_features, local_features, params,
                       mxu_dtype=None):
    """Pure-JAX reference (mirrors the PyTorch forward).

    If mxu_dtype is given, matmul operands are cast to it with f32
    accumulation, mirroring the kernel's bf16-operand / f32-accumulate path.
    """
    w1, b1, w2, b2, w3, b3, w4, b4 = params

    def mm(x, w):
        if mxu_dtype is None:
            return x @ w
        return jnp.dot(x.astype(mxu_dtype), w.astype(mxu_dtype),
                       preferred_element_type=jnp.float32)

    combined = jnp.concatenate([global_features, local_features], axis=-1)
    h1 = jnp.maximum(mm(combined, w1) + b1[0], 0.0)
    flow = mm(h1, w2) + b2[0]
    refined = local_features + flow
    final = jnp.concatenate([refined, global_features], axis=-1)
    h2 = jnp.maximum(mm(final, w3) + b3[0], 0.0)
    return mm(h2, w4) + b4[0]


if __name__ == "__main__":
    key = jax.random.PRNGKey(0)
    k_g, k_l, k_p = jax.random.split(key, 3)

    global_dim, local_dim = 32, 32
    params = init_params(k_p, global_dim, local_dim)

    # Case 1: small, tile-aligned leading dims.
    batch, seq = 2, 8
    gfeat = jax.random.normal(k_g, (batch, seq, global_dim), jnp.float32)
    lfeat = jax.random.normal(k_l, (batch, seq, local_dim), jnp.float32)
    out = feature_fusion_forward(gfeat, lfeat, params)
    out = jax.block_until_ready(out)
    assert out.shape == (batch, seq, local_dim + global_dim)
    # Precision-matched reference (bf16 operands, f32 accumulation).
    ref_bf16 = feature_fusion_ref(gfeat, lfeat, params, mxu_dtype=jnp.bfloat16)
    assert jnp.allclose(out, ref_bf16, atol=2e-3, rtol=2e-3)
    # Loose sanity vs. the pure-f32 PyTorch-equivalent forward.
    ref_f32 = feature_fusion_ref(gfeat, lfeat, params)
    assert jnp.allclose(out, ref_f32, atol=2.5e-1, rtol=2.5e-1)

    # Case 2: ragged row count (15 rows) exercises the cdiv / masked-tile path.
    gfeat2 = jax.random.normal(k_g, (3, 5, global_dim), jnp.float32)
    lfeat2 = jax.random.normal(k_l, (3, 5, local_dim), jnp.float32)
    out2 = feature_fusion_forward(gfeat2, lfeat2, params)
    out2 = jax.block_until_ready(out2)
    assert out2.shape == (3, 5, local_dim + global_dim)
    ref2 = feature_fusion_ref(gfeat2, lfeat2, params, mxu_dtype=jnp.bfloat16)
    assert jnp.allclose(out2, ref2, atol=2e-3, rtol=2e-3)

    print("KERNEL_OK")
</pallas_src>

<mosaic_0001>
module attributes {stable_mosaic.version = 11 : i64} {
  func.func @_ffm_kernel(%arg0: i32, %arg1: memref<16x32xf32, #tpu.memory_space<vmem>>, %arg2: memref<16x32xf32, #tpu.memory_space<vmem>>, %arg3: memref<32x32xbf16, #tpu.memory_space<vmem>>, %arg4: memref<32x32xbf16, #tpu.memory_space<vmem>>, %arg5: memref<1x32xf32, #tpu.memory_space<vmem>>, %arg6: memref<32x32xbf16, #tpu.memory_space<vmem>>, %arg7: memref<1x32xf32, #tpu.memory_space<vmem>>, %arg8: memref<32x128xbf16, #tpu.memory_space<vmem>>, %arg9: memref<32x128xbf16, #tpu.memory_space<vmem>>, %arg10: memref<1x128xf32, #tpu.memory_space<vmem>>, %arg11: memref<128x128xbf16, #tpu.memory_space<vmem>>, %arg12: memref<1x128xf32, #tpu.memory_space<vmem>>, %arg13: memref<16x128xf32, #tpu.memory_space<vmem>>) attributes {dimension_semantics = [#tpu.dimension_semantics<parallel>], iteration_bounds = array<i64: 1>, scalar_prefetch = 0 : i64, scratch_operands = 0 : i64, tpu.core_type = #tpu.core_type<tc>, window_params = [{transform_indices = @transform_0, window_bounds = array<i64: 16, 32>}, {transform_indices = @transform_1, window_bounds = array<i64: 16, 32>}, {pipeline_mode = #tpu.pipeline_mode<synchronous>, transform_indices = @transform_2, window_bounds = array<i64: 32, 32>}, {pipeline_mode = #tpu.pipeline_mode<synchronous>, transform_indices = @transform_3, window_bounds = array<i64: 32, 32>}, {pipeline_mode = #tpu.pipeline_mode<synchronous>, transform_indices = @transform_4, window_bounds = array<i64: 1, 32>}, {pipeline_mode = #tpu.pipeline_mode<synchronous>, transform_indices = @transform_5, window_bounds = array<i64: 32, 32>}, {pipeline_mode = #tpu.pipeline_mode<synchronous>, transform_indices = @transform_6, window_bounds = array<i64: 1, 32>}, {pipeline_mode = #tpu.pipeline_mode<synchronous>, transform_indices = @transform_7, window_bounds = array<i64: 32, 128>}, {pipeline_mode = #tpu.pipeline_mode<synchronous>, transform_indices = @transform_8, window_bounds = array<i64: 32, 128>}, {pipeline_mode = #tpu.pipeline_mode<synchronous>, transform_indices = @transform_9, window_bounds = array<i64: 1, 128>}, {pipeline_mode = #tpu.pipeline_mode<synchronous>, transform_indices = @transform_10, window_bounds = array<i64: 128, 128>}, {pipeline_mode = #tpu.pipeline_mode<synchronous>, transform_indices = @transform_11, window_bounds = array<i64: 1, 128>}, {transform_indices = @transform_12, window_bounds = array<i64: 16, 128>}]} {
    %c0 = arith.constant 0 : index
    %c0_0 = arith.constant 0 : index
    %0 = vector.load %arg1[%c0, %c0_0] : memref<16x32xf32, #tpu.memory_space<vmem>>, vector<16x32xf32>
    %1 = arith.truncf %0 : vector<16x32xf32> to vector<16x32xbf16>
    %c0_1 = arith.constant 0 : index
    %c0_2 = arith.constant 0 : index
    %2 = vector.load %arg2[%c0_1, %c0_2] : memref<16x32xf32, #tpu.memory_space<vmem>>, vector<16x32xf32>
    %c0_3 = arith.constant 0 : index
    %c0_4 = arith.constant 0 : index
    %3 = vector.load %arg2[%c0_3, %c0_4] : memref<16x32xf32, #tpu.memory_space<vmem>>, vector<16x32xf32>
    %4 = arith.truncf %3 : vector<16x32xf32> to vector<16x32xbf16>
    %c0_5 = arith.constant 0 : index
    %c0_6 = arith.constant 0 : index
    %5 = vector.load %arg3[%c0_5, %c0_6] : memref<32x32xbf16, #tpu.memory_space<vmem>>, vector<32x32xbf16>
    %cst = arith.constant dense<0.000000e+00> : vector<16x32xf32>
    %6 = tpu.matmul %1, %5, %cst {dimension_numbers = #tpu.dot_dimension_numbers<[1], [0], [0], [1], [0, 0, 1, 1], [], []>} : vector<16x32xbf16>, vector<32x32xbf16>, vector<16x32xf32> -> vector<16x32xf32>
    %c0_7 = arith.constant 0 : index
    %c0_8 = arith.constant 0 : index
    %7 = vector.load %arg4[%c0_7, %c0_8] : memref<32x32xbf16, #tpu.memory_space<vmem>>, vector<32x32xbf16>
    %cst_9 = arith.constant dense<0.000000e+00> : vector<16x32xf32>
    %8 = tpu.matmul %4, %7, %cst_9 {dimension_numbers = #tpu.dot_dimension_numbers<[1], [0], [0], [1], [0, 0, 1, 1], [], []>} : vector<16x32xbf16>, vector<32x32xbf16>, vector<16x32xf32> -> vector<16x32xf32>
    %9 = arith.addf %6, %8 : vector<16x32xf32>
    %c0_10 = arith.constant 0 : index
    %c0_11 = arith.constant 0 : index
    %10 = vector.load %arg5[%c0_10, %c0_11] : memref<1x32xf32, #tpu.memory_space<vmem>>, vector<1x32xf32>
    %11 = vector.broadcast %10 : vector<1x32xf32> to vector<16x32xf32>
    %12 = arith.addf %9, %11 : vector<16x32xf32>
    %cst_12 = arith.constant 0.000000e+00 : f32
    %13 = vector.broadcast %cst_12 : f32 to vector<16x32xf32>
    %14 = arith.maximumf %12, %13 : vector<16x32xf32>
    %15 = arith.truncf %14 : vector<16x32xf32> to vector<16x32xbf16>
    %c0_13 = arith.constant 0 : index
    %c0_14 = arith.constant 0 : index
    %16 = vector.load %arg6[%c0_13, %c0_14] : memref<32x32xbf16, #tpu.memory_space<vmem>>, vector<32x32xbf16>
    %cst_15 = arith.constant dense<0.000000e+00> : vector<16x32xf32>
    %17 = tpu.matmul %15, %16, %cst_15 {dimension_numbers = #tpu.dot_dimension_numbers<[1], [0], [0], [1], [0, 0, 1, 1], [], []>} : vector<16x32xbf16>, vector<32x32xbf16>, vector<16x32xf32> -> vector<16x32xf32>
    %c0_16 = arith.constant 0 : index
    %c0_17 = arith.constant 0 : index
    %18 = vector.load %arg7[%c0_16, %c0_17] : memref<1x32xf32, #tpu.memory_space<vmem>>, vector<1x32xf32>
    %19 = vector.broadcast %18 : vector<1x32xf32> to vector<16x32xf32>
    %20 = arith.addf %17, %19 : vector<16x32xf32>
    %21 = arith.addf %2, %20 : vector<16x32xf32>
    %22 = arith.truncf %21 : vector<16x32xf32> to vector<16x32xbf16>
    %c0_18 = arith.constant 0 : index
    %c0_19 = arith.constant 0 : index
    %23 = vector.load %arg8[%c0_18, %c0_19] : memref<32x128xbf16, #tpu.memory_space<vmem>>, vector<32x128xbf16>
    %cst_20 = arith.constant dense<0.000000e+00> : vector<16x128xf32>
    %24 = tpu.matmul %22, %23, %cst_20 {dimension_numbers = #tpu.dot_dimension_numbers<[1], [0], [0], [1], [0, 0, 1, 1], [], []>} : vector<16x32xbf16>, vector<32x128xbf16>, vector<16x128xf32> -> vector<16x128xf32>
    %c0_21 = arith.constant 0 : index
    %c0_22 = arith.constant 0 : index
    %25 = vector.load %arg9[%c0_21, %c0_22] : memref<32x128xbf16, #tpu.memory_space<vmem>>, vector<32x128xbf16>
    %cst_23 = arith.constant dense<0.000000e+00> : vector<16x128xf32>
    %26 = tpu.matmul %1, %25, %cst_23 {dimension_numbers = #tpu.dot_dimension_numbers<[1], [0], [0], [1], [0, 0, 1, 1], [], []>} : vector<16x32xbf16>, vector<32x128xbf16>, vector<16x128xf32> -> vector<16x128xf32>
    %27 = arith.addf %24, %26 : vector<16x128xf32>
    %c0_24 = arith.constant 0 : index
    %c0_25 = arith.constant 0 : index
    %28 = vector.load %arg10[%c0_24, %c0_25] : memref<1x128xf32, #tpu.memory_space<vmem>>, vector<1x128xf32>
    %29 = vector.broadcast %28 : vector<1x128xf32> to vector<16x128xf32>
    %30 = arith.addf %27, %29 : vector<16x128xf32>
    %cst_26 = arith.constant 0.000000e+00 : f32
    %31 = vector.broadcast %cst_26 : f32 to vector<16x128xf32>
    %32 = arith.maximumf %30, %31 : vector<16x128xf32>
    %33 = arith.truncf %32 : vector<16x128xf32> to vector<16x128xbf16>
    %c0_27 = arith.constant 0 : index
    %c0_28 = arith.constant 0 : index
    %34 = vector.load %arg11[%c0_27, %c0_28] : memref<128x128xbf16, #tpu.memory_space<vmem>>, vector<128x128xbf16>
    %cst_29 = arith.constant dense<0.000000e+00> : vector<16x128xf32>
    %35 = tpu.matmul %33, %34, %cst_29 {dimension_numbers = #tpu.dot_dimension_numbers<[1], [0], [0], [1], [0, 0, 1, 1], [], []>} : vector<16x128xbf16>, vector<128x128xbf16>, vector<16x128xf32> -> vector<16x128xf32>
    %c0_30 = arith.constant 0 : index
    %c0_31 = arith.constant 0 : index
    %36 = vector.load %arg12[%c0_30, %c0_31] : memref<1x128xf32, #tpu.memory_space<vmem>>, vector<1x128xf32>
    %37 = vector.broadcast %36 : vector<1x128xf32> to vector<16x128xf32>
    %38 = arith.addf %35, %37 : vector<16x128xf32>
    %c0_32 = arith.constant 0 : index
    %c0_33 = arith.constant 0 : index
    %39 = vector.load %arg13[%c0_32, %c0_33] : memref<16x128xf32, #tpu.memory_space<vmem>>, vector<16x128xf32>
    tpu.vector_store %arg13[%c0_32, %c0_33], %38 {strides = array<i32>} : memref<16x128xf32, #tpu.memory_space<vmem>>, vector<16x128xf32>,
    return
  }
  func.func @transform_0(%arg0: i32) -> (i32, i32) {
    %c0_i32 = arith.constant 0 : i32
    %c0_i32_0 = arith.constant 0 : i32
    return %arg0, %c0_i32 : i32, i32
  }
  func.func @transform_1(%arg0: i32) -> (i32, i32) {
    %c0_i32 = arith.constant 0 : i32
    %c0_i32_0 = arith.constant 0 : i32
    return %arg0, %c0_i32 : i32, i32
  }
  func.func @transform_2(%arg0: i32) -> (i32, i32) {
    %c0_i32 = arith.constant 0 : i32
    %c0_i32_0 = arith.constant 0 : i32
    %c0_i32_1 = arith.constant 0 : i32
    return %c0_i32, %c0_i32_0 : i32, i32
  }
  func.func @transform_3(%arg0: i32) -> (i32, i32) {
    %c0_i32 = arith.constant 0 : i32
    %c0_i32_0 = arith.constant 0 : i32
    %c0_i32_1 = arith.constant 0 : i32
    return %c0_i32, %c0_i32_0 : i32, i32
  }
  func.func @transform_4(%arg0: i32) -> (i32, i32) {
    %c0_i32 = arith.constant 0 : i32
    %c0_i32_0 = arith.constant 0 : i32
    %c0_i32_1 = arith.constant 0 : i32
    return %c0_i32, %c0_i32_0 : i32, i32
  }
  func.func @transform_5(%arg0: i32) -> (i32, i32) {
    %c0_i32 = arith.constant 0 : i32
    %c0_i32_0 = arith.constant 0 : i32
    %c0_i32_1 = arith.constant 0 : i32
    return %c0_i32, %c0_i32_0 : i32, i32
  }
  func.func @transform_6(%arg0: i32) -> (i32, i32) {
    %c0_i32 = arith.constant 0 : i32
    %c0_i32_0 = arith.constant 0 : i32
    %c0_i32_1 = arith.constant 0 : i32
    return %c0_i32, %c0_i32_0 : i32, i32
  }
  func.func @transform_7(%arg0: i32) -> (i32, i32) {
    %c0_i32 = arith.constant 0 : i32
    %c0_i32_0 = arith.constant 0 : i32
    %c0_i32_1 = arith.constant 0 : i32
    return %c0_i32, %c0_i32_0 : i32, i32
  }
  func.func @transform_8(%arg0: i32) -> (i32, i32) {
    %c0_i32 = arith.constant 0 : i32
    %c0_i32_0 = arith.constant 0 : i32
    %c0_i32_1 = arith.constant 0 : i32
    return %c0_i32, %c0_i32_0 : i32, i32
  }
  func.func @transform_9(%arg0: i32) -> (i32, i32) {
    %c0_i32 = arith.constant 0 : i32
    %c0_i32_0 = arith.constant 0 : i32
    %c0_i32_1 = arith.constant 0 : i32
    return %c0_i32, %c0_i32_0 : i32, i32
  }
  func.func @transform_10(%arg0: i32) -> (i32, i32) {
    %c0_i32 = arith.constant 0 : i32
    %c0_i32_0 = arith.constant 0 : i32
    %c0_i32_1 = arith.constant 0 : i32
    return %c0_i32, %c0_i32_0 : i32, i32
  }
  func.func @transform_11(%arg0: i32) -> (i32, i32) {
    %c0_i32 = arith.constant 0 : i32
    %c0_i32_0 = arith.constant 0 : i32
    %c0_i32_1 = arith.constant 0 : i32
    return %c0_i32, %c0_i32_0 : i32, i32
  }
  func.func @transform_12(%arg0: i32) -> (i32, i32) {
    %c0_i32 = arith.constant 0 : i32
    %c0_i32_0 = arith.constant 0 : i32
    return %arg0, %c0_i32 : i32, i32
  }
}

</mosaic_0001>

<llo_original>
// kernel: tpu_custom_call.1
$region0: #{tpu_custom_call.1}
  #allocation0 [shape = 'u32[]', space=smem, size = 0x4, offset = 0x4, fixed_abs, tag = 'smem constant byte address 0x4 - core index']
  #allocation1 [shape = 'u32[72,128]{1,0:T(1,128)}', space=vmem, size = 0x9000, scoped, tag = 'internal scratch']
  %s0 = inlined_call_operand.hbm [shape: f32[16,32], index: 0, kind: input, shape index: {}]
  %s1 = inlined_call_operand.hbm [shape: f32[16,32], index: 1, kind: input, shape index: {}]
  %s2 = inlined_call_operand.hbm [shape: bf16[32,32], index: 2, kind: input, shape index: {}]
  %s3 = inlined_call_operand.hbm [shape: bf16[32,32], index: 3, kind: input, shape index: {}]
  %s4 = inlined_call_operand.vmem [shape: f32[1,32], index: 4, kind: input, shape index: {}]
  %s5 = inlined_call_operand.hbm [shape: bf16[32,32], index: 5, kind: input, shape index: {}]
  %s6 = inlined_call_operand.vmem [shape: f32[1,32], index: 6, kind: input, shape index: {}]
  %s7 = inlined_call_operand.hbm [shape: bf16[32,128], index: 7, kind: input, shape index: {}]
  %s8 = inlined_call_operand.hbm [shape: bf16[32,128], index: 8, kind: input, shape index: {}]
  %s9 = inlined_call_operand.vmem [shape: f32[1,128], index: 9, kind: input, shape index: {}]
  %s10 = inlined_call_operand.hbm [shape: bf16[128,128], index: 10, kind: input, shape index: {}]
  %s11 = inlined_call_operand.vmem [shape: f32[1,128], index: 11, kind: input, shape index: {}]
  %s12 = inlined_call_operand.hbm [shape: f32[16,128], index: 12, kind: output, shape index: {}]
  %s13 = sld [smem:[#allocation0]]
  $region90: #{tpu_custom_call.1} parent=0
    _
  %s15 = ssub.s32 1, %s13
  %s16 = scalar_select 0, %s15, %s13
  $region1: #{tpu_custom_call.1} parent=0
    #allocation2 [shape = 'u8[8192]{0}', space=vmem, size = 0x2000, scoped, tag = 'input window, operand 0, single buffered']
    #allocation3 [shape = 's32[1]{0}', space=sflag, size = 0x4, scoped, tag = 'scoped memory for tpu_custom_call.1']
    #allocation4 [shape = 's32[1]{0}', space=sflag, size = 0x4, scoped, tag = 'scoped memory for tpu_custom_call.1']
    #allocation5 [shape = 'u8[8192]{0}', space=vmem, size = 0x2000, scoped, tag = 'input window, operand 1, single buffered']
    #allocation6 [shape = 's32[1]{0}', space=sflag, size = 0x4, scoped, tag = 'scoped memory for tpu_custom_call.1']
    #allocation7 [shape = 'u8[8192]{0}', space=vmem, size = 0x2000, scoped, tag = 'input window, operand 2, single buffered']
    #allocation8 [shape = 'u8[8192]{0}', space=vmem, size = 0x2000, scoped, tag = 'input window, operand 3, single buffered']
    #allocation9 [shape = 's32[1]{0}', space=sflag, size = 0x4, scoped, tag = 'scoped memory for tpu_custom_call.1']
    #allocation10 [shape = 'u8[8192]{0}', space=vmem, size = 0x2000, scoped, tag = 'input window, operand 5, single buffered']
    #allocation11 [shape = 'u8[8192]{0}', space=vmem, size = 0x2000, scoped, tag = 'input window, operand 7, single buffered']
    #allocation12 [shape = 's32[1]{0}', space=sflag, size = 0x4, scoped, tag = 'scoped memory for tpu_custom_call.1']
    #allocation13 [shape = 'u8[8192]{0}', space=vmem, size = 0x2000, scoped, tag = 'input window, operand 8, single buffered']
    #allocation14 [shape = 'u8[32768]{0}', space=vmem, size = 0x8000, scoped, tag = 'input window, operand 10, single buffered']
    #allocation15 [shape = 's32[1]{0}', space=sflag, size = 0x4, scoped, tag = 'scoped memory for tpu_custom_call.1']
    #allocation16 [shape = 'u8[8192]{0}', space=vmem, size = 0x2000, scoped, tag = 'output window, operand 0, single buffered']
    %17 = vsyncpa [#allocation3], 0
    %18 = vsyncpa [#allocation6], 0
    %19 = vsyncpa [#allocation9], 0
    %20 = vsyncpa [#allocation12], 0
    %21 = vsyncpa [#allocation15], 0
    %22 = vsyncpa [#allocation4], 0
    // Predicated region
    $region2: #{tpu_custom_call.1} parent=1 // pred_check
      _
    $region3: #{tpu_custom_call.1} parent=1 // pred_check_branch
      %24 = sbr.rel (0) target = $region5
    $region4: #{tpu_custom_call.1} parent=1 // pred_region
      %26 = vsyncadd [#allocation3], 0
      %s27 = sshll.u32 %s0, 4
      %s28 = int_to_ptr.hbm [resolvable:$true] %s27
      %s29 = sshll.u32 [#allocation2], 4
      %s30 = int_to_ptr.vmem [resolvable:$true] %s29
      %35 = dma.hbm_to_vmem [thread:$0]  %s28, 256, %s30, [#allocation3], 128, 128, 8
    $region5: #{tpu_custom_call.1} parent=1 // pred_fallthru
      _
    // Predicated region
    $region6: #{tpu_custom_call.1} parent=1 // pred_check
      _
    $region7: #{tpu_custom_call.1} parent=1 // pred_check_branch
      %37 = sbr.rel (0) target = $region9
    $region8: #{tpu_custom_call.1} parent=1 // pred_region
      %39 = vsyncadd [#allocation6], 0
      %s40 = sshll.u32 %s1, 4
      %s41 = int_to_ptr.hbm [resolvable:$true] %s40
      %s42 = sshll.u32 [#allocation5], 4
      %s43 = int_to_ptr.vmem [resolvable:$true] %s42
      %48 = dma.hbm_to_vmem [thread:$0]  %s41, 256, %s43, [#allocation6], 128, 128, 8
    $region9: #{tpu_custom_call.1} parent=1 // pred_fallthru
      _
    // Predicated region
    $region10: #{tpu_custom_call.1} parent=1 // pred_check
      _
    $region11: #{tpu_custom_call.1} parent=1 // pred_check_branch
      %50 = sbr.rel (0) target = $region13
    $region12: #{tpu_custom_call.1} parent=1 // pred_region
      %52 = vsyncadd [#allocation6], 0
      %s53 = sshll.u32 %s2, 4
      %s54 = int_to_ptr.hbm [resolvable:$true] %s53
      %s55 = sshll.u32 [#allocation7], 4
      %s56 = int_to_ptr.vmem [resolvable:$true] %s55
      %61 = dma.hbm_to_vmem [thread:$0]  %s54, 256, %s56, [#allocation6], 64, 64, 4
    $region13: #{tpu_custom_call.1} parent=1 // pred_fallthru
      _
    // Predicated region
    $region14: #{tpu_custom_call.1} parent=1 // pred_check
      _
    $region15: #{tpu_custom_call.1} parent=1 // pred_check_branch
      %63 = sbr.rel (0) target = $region17
    $region16: #{tpu_custom_call.1} parent=1 // pred_region
      %65 = vsyncadd [#allocation9], 0
      %s66 = sshll.u32 %s3, 4
      %s67 = int_to_ptr.hbm [resolvable:$true] %s66
      %s68 = sshll.u32 [#allocation8], 4
      %s69 = int_to_ptr.vmem [resolvable:$true] %s68
      %74 = dma.hbm_to_vmem [thread:$0]  %s67, 256, %s69, [#allocation9], 64, 64, 4
    $region17: #{tpu_custom_call.1} parent=1 // pred_fallthru
      _
    // Predicated region
    $region18: #{tpu_custom_call.1} parent=1 // pred_check
      _
    $region19: #{tpu_custom_call.1} parent=1 // pred_check_branch
      %76 = sbr.rel (0) target = $region21
    $region20: #{tpu_custom_call.1} parent=1 // pred_region
      _
    $region21: #{tpu_custom_call.1} parent=1 // pred_fallthru
      _
    // Predicated region
    $region22: #{tpu_custom_call.1} parent=1 // pred_check
      _
    $region23: #{tpu_custom_call.1} parent=1 // pred_check_branch
      %78 = sbr.rel (0) target = $region25
    $region24: #{tpu_custom_call.1} parent=1 // pred_region
      %80 = vsyncadd [#allocation9], 0
      %s81 = sshll.u32 %s5, 4
      %s82 = int_to_ptr.hbm [resolvable:$true] %s81
      %s83 = sshll.u32 [#allocation10], 4
      %s84 = int_to_ptr.vmem [resolvable:$true] %s83
      %89 = dma.hbm_to_vmem [thread:$0]  %s82, 256, %s84, [#allocation9], 64, 64, 4
    $region25: #{tpu_custom_call.1} parent=1 // pred_fallthru
      _
    // Predicated region
    $region26: #{tpu_custom_call.1} parent=1 // pred_check
      _
    $region27: #{tpu_custom_call.1} parent=1 // pred_check_branch
      %91 = sbr.rel (0) target = $region29
    $region28: #{tpu_custom_call.1} parent=1 // pred_region
      _
    $region29: #{tpu_custom_call.1} parent=1 // pred_fallthru
      _
    // Predicated region
    $region30: #{tpu_custom_call.1} parent=1 // pred_check
      _
    $region31: #{tpu_custom_call.1} parent=1 // pred_check_branch
      %93 = sbr.rel (0) target = $region33
    $region32: #{tpu_custom_call.1} parent=1 // pred_region
      %95 = vsyncadd [#allocation12], 0
      %s96 = sshll.u32 %s7, 4
      %s97 = int_to_ptr.hbm [resolvable:$true] %s96
      %s98 = sshll.u32 [#allocation11], 4
      %s99 = int_to_ptr.vmem [resolvable:$true] %s98
      %104 = dma.hbm_to_vmem [thread:$0]  %s97, 256, %s99, [#allocation12], 64, 64, 4
    $region33: #{tpu_custom_call.1} parent=1 // pred_fallthru
      _
    // Predicated region
    $region34: #{tpu_custom_call.1} parent=1 // pred_check
      _
    $region35: #{tpu_custom_call.1} parent=1 // pred_check_branch
      %106 = sbr.rel (0) target = $region37
    $region36: #{tpu_custom_call.1} parent=1 // pred_region
      %108 = vsyncadd [#allocation12], 0
      %s109 = sshll.u32 %s8, 4
      %s110 = int_to_ptr.hbm [resolvable:$true] %s109
      %s111 = sshll.u32 [#allocation13], 4
      %s112 = int_to_ptr.vmem [resolvable:$true] %s111
      %117 = dma.hbm_to_vmem [thread:$0]  %s110, 256, %s112, [#allocation12], 64, 64, 4
    $region37: #{tpu_custom_call.1} parent=1 // pred_fallthru
      _
    // Predicated region
    $region38: #{tpu_custom_call.1} parent=1 // pred_check
      _
    $region39: #{tpu_custom_call.1} parent=1 // pred_check_branch
      %119 = sbr.rel (0) target = $region41
    $region40: #{tpu_custom_call.1} parent=1 // pred_region
      _
    $region41: #{tpu_custom_call.1} parent=1 // pred_fallthru
      _
    // Predicated region
    $region42: #{tpu_custom_call.1} parent=1 // pred_check
      _
    $region43: #{tpu_custom_call.1} parent=1 // pred_check_branch
      %121 = sbr.rel (0) target = $region45
    $region44: #{tpu_custom_call.1} parent=1 // pred_region
      %123 = vsyncadd [#allocation15], 0
      %s124 = sshll.u32 %s10, 4
      %s125 = int_to_ptr.hbm [resolvable:$true] %s124
      %s126 = sshll.u32 [#allocation14], 4
      %s127 = int_to_ptr.vmem [resolvable:$true] %s126
      %132 = dma.hbm_to_vmem [thread:$0]  %s125, 1024, %s127, [#allocation15], 64, 64, 4
    $region45: #{tpu_custom_call.1} parent=1 // pred_fallthru
      _
    // Predicated region
    $region46: #{tpu_custom_call.1} parent=1 // pred_check
      _
    $region47: #{tpu_custom_call.1} parent=1 // pred_check_branch
      %134 = sbr.rel (0) target = $region49
    $region48: #{tpu_custom_call.1} parent=1 // pred_region
      _
    $region49: #{tpu_custom_call.1} parent=1 // pred_fallthru
      _
    // Predicated region
    $region50: #{tpu_custom_call.1} parent=1 // pred_check
      _
    $region51: #{tpu_custom_call.1} parent=1 // pred_check_branch
      %136 = sbr.rel (0) target = $region53
    $region52: #{tpu_custom_call.1} parent=1 // pred_region
      %138 = dma.done [#allocation3], 256
    $region53: #{tpu_custom_call.1} parent=1 // pred_fallthru
      _
    // Predicated region
    $region54: #{tpu_custom_call.1} parent=1 // pred_check
      _
    $region55: #{tpu_custom_call.1} parent=1 // pred_check_branch
      %140 = sbr.rel (0) target = $region57
    $region56: #{tpu_custom_call.1} parent=1 // pred_region
      %142 = dma.done [#allocation6], 256
    $region57: #{tpu_custom_call.1} parent=1 // pred_fallthru
      _
    // Predicated region
    $region58: #{tpu_custom_call.1} parent=1 // pred_check
      _
    $region59: #{tpu_custom_call.1} parent=1 // pred_check_branch
      %144 = sbr.rel (0) target = $region61
    $region60: #{tpu_custom_call.1} parent=1 // pred_region
      %146 = dma.done [#allocation6], 256
    $region61: #{tpu_custom_call.1} parent=1 // pred_fallthru
      _
    // Predicated region
    $region62: #{tpu_custom_call.1} parent=1 // pred_check
      _
    $region63: #{tpu_custom_call.1} parent=1 // pred_check_branch
      %148 = sbr.rel (0) target = $region65
    $region64: #{tpu_custom_call.1} parent=1 // pred_region
      %150 = dma.done [#allocation9], 256
    $region65: #{tpu_custom_call.1} parent=1 // pred_fallthru
      _
    // Predicated region
    $region66: #{tpu_custom_call.1} parent=1 // pred_check
      _
    $region67: #{tpu_custom_call.1} parent=1 // pred_check_branch
      %152 = sbr.rel (0) target = $region69
    $region68: #{tpu_custom_call.1} parent=1 // pred_region
      %154 = dma.done [#allocation9], 256
    $region69: #{tpu_custom_call.1} parent=1 // pred_fallthru
      _
    // Predicated region
    $region70: #{tpu_custom_call.1} parent=1 // pred_check
      _
    $region71: #{tpu_custom_call.1} parent=1 // pred_check_branch
      %156 = sbr.rel (0) target = $region73
    $region72: #{tpu_custom_call.1} parent=1 // pred_region
      %158 = dma.done [#allocation12], 256
    $region73: #{tpu_custom_call.1} parent=1 // pred_fallthru
      _
    // Predicated region
    $region74: #{tpu_custom_call.1} parent=1 // pred_check
      _
    $region75: #{tpu_custom_call.1} parent=1 // pred_check_branch
      %160 = sbr.rel (0) target = $region77
    $region76: #{tpu_custom_call.1} parent=1 // pred_region
      %162 = dma.done [#allocation12], 256
    $region77: #{tpu_custom_call.1} parent=1 // pred_fallthru
      _
    // Predicated region
    $region78: #{tpu_custom_call.1} parent=1 // pred_check
      _
    $region79: #{tpu_custom_call.1} parent=1 // pred_check_branch
      %164 = sbr.rel (0) target = $region81
    $region80: #{tpu_custom_call.1} parent=1 // pred_region
      %166 = dma.done [#allocation15], 1024
    $region81: #{tpu_custom_call.1} parent=1 // pred_fallthru
      _
    %v168 = vld [vmem:[#allocation2] sm:$0xff]
    %v169 = vld [vmem:[#allocation2 + $0x8] sm:$0xff]
    %v170 = vpack.c.bf16 %v169, %v168
    %v171 = vld [vmem:[#allocation5] sm:$0xff]
    %v172 = vld [vmem:[#allocation5 + $0x8] sm:$0xff]
    %v173 = vpack.c.bf16 %v172, %v171
    %v174 = vld [vmem:[#allocation7] sm:$0xf]
    %v175 = vld [vmem:[#allocation7 + $0x4] sm:$0xf]
    %v176 = vld [vmem:[#allocation7 + $0x8] sm:$0xf]
    %v177 = vld [vmem:[#allocation7 + $0xc] sm:$0xf]
    %v178 = vld [vmem:[#allocation8] sm:$0xf]
    %v179 = vld [vmem:[#allocation8 + $0x4] sm:$0xf]
    %v180 = vld [vmem:[#allocation8 + $0x8] sm:$0xf]
    %v181 = vld [vmem:[#allocation8 + $0xc] sm:$0xf]
    %v186 = vunpack.c.l.b16 %v178
    %v187 = vunpack.c.l.b16 %v179
    %v188 = vunpack.c.l.b16 %v180
    %v189 = vunpack.c.l.b16 %v181
    %v190 = vpack.c.b16 %v187, %v186
    %v191 = vpack.c.b16 %v189, %v188
    %vm194 = vcmask 261120
    %v196 = vsel %vm194, %v173, 0
    %198 = vmatpush.bf16.msra.mxu0 0
    %199 = vmatpush.bf16.msra.mxu0 0
    %200 = vmatpush.bf16.msra.mxu0 0
    %201 = vmatpush.bf16.msra.mxu0 0
    %202 = vmatpush.bf16.msra.mxu0 0
    %203 = vmatpush.bf16.msra.mxu0 0
    %204 = vmatpush.bf16.msra.mxu0 %v191
    %205 = vmatpush.bf16.msra.mxu0 %v190
    %206 = vmatmul.bf16.gmra.mxu0 %v196
    %v207 = vpop.f32.mrf.mxu0
    %v208 = vadd.f32 0.0, %v207
    %v209 = vpop.f32.mrf.mxu0
    %v210 = vadd.f32 0.0, %v209
    %211 = vdwg.mxu0
    %v216 = vunpack.c.l.b16 %v174
    %v217 = vunpack.c.l.b16 %v175
    %v218 = vunpack.c.l.b16 %v176
    %v219 = vunpack.c.l.b16 %v177
    %v220 = vpack.c.b16 %v217, %v216
    %v221 = vpack.c.b16 %v219, %v218
    %v225 = vsel %vm194, %v170, 0
    %227 = vmatpush.bf16.msra.mxu0 0
    %228 = vmatpush.bf16.msra.mxu0 0
    %229 = vmatpush.bf16.msra.mxu0 0
    %230 = vmatpush.bf16.msra.mxu0 0
    %231 = vmatpush.bf16.msra.mxu0 0
    %232 = vmatpush.bf16.msra.mxu0 0
    %233 = vmatpush.bf16.msra.mxu0 %v221
    %234 = vmatpush.bf16.msra.mxu0 %v220
    %235 = vmatmul.bf16.gmra.mxu0 %v225
    %v236 = vpop.f32.mrf.mxu0
    %v237 = vadd.f32 %v208, %v236
    %v238 = vpop.f32.mrf.mxu0
    %v239 = vadd.f32 %v210, %v238
    %240 = vdwg.mxu0
    %v241 = vld [vmem:[%s4] sm:$0x1]
    %v243 = vperm.slane %v241, 0
    %v245 = vadd.f32 %v237, %v243
    %v246 = vadd.f32 %v239, %v243
    %v247 = vmax.f32 %v245, 0.0
    %v248 = vmax.f32 %v246, 0.0
    %v249 = vpack.c.bf16 %v248, %v247
    %v250 = vld [vmem:[#allocation10] sm:$0xf]
    %v251 = vld [vmem:[#allocation10 + $0x4] sm:$0xf]
    %v252 = vld [vmem:[#allocation10 + $0x8] sm:$0xf]
    %v253 = vld [vmem:[#allocation10 + $0xc] sm:$0xf]
    %v254 = vld [vmem:[%s6] sm:$0x1]
    %v256 = vperm.slane %v254, 0
    %v262 = vunpack.c.l.b16 %v250
    %v263 = vunpack.c.l.b16 %v251
    %v264 = vunpack.c.l.b16 %v252
    %v265 = vunpack.c.l.b16 %v253
    %v266 = vpack.c.b16 %v263, %v262
    %v267 = vpack.c.b16 %v265, %v264
    %v271 = vsel %vm194, %v249, 0
    %273 = vmatpush.bf16.msra.mxu0 0
    %274 = vmatpush.bf16.msra.mxu0 0
    %275 = vmatpush.bf16.msra.mxu0 0
    %276 = vmatpush.bf16.msra.mxu0 0
    %277 = vmatpush.bf16.msra.mxu0 0
    %278 = vmatpush.bf16.msra.mxu0 0
    %279 = vmatpush.bf16.msra.mxu0 %v267
    %280 = vmatpush.bf16.msra.mxu0 %v266
    %281 = vmatmul.bf16.gmra.mxu0 %v271
    %v282 = vpop.f32.mrf.mxu0
    %v283 = vadd.f32 %v256, %v282
    %v284 = vpop.f32.mrf.mxu0
    %v285 = vadd.f32 %v256, %v284
    %286 = vdwg.mxu0
    %v287 = vadd.f32 %v171, %v283
    %v288 = vadd.f32 %v172, %v285
    %v289 = vpack.c.bf16 %v288, %v287
    %v290 = vld [vmem:[#allocation11] sm:$0xf]
    %v291 = vld [vmem:[#allocation11 + $0x4] sm:$0xf]
    %v292 = vld [vmem:[#allocation11 + $0x8] sm:$0xf]
    %v293 = vld [vmem:[#allocation11 + $0xc] sm:$0xf]
    %v294 = vld [vmem:[#allocation13] sm:$0xf]
    %v295 = vld [vmem:[#allocation13 + $0x4] sm:$0xf]
    %v296 = vld [vmem:[#allocation13 + $0x8] sm:$0xf]
    %v297 = vld [vmem:[#allocation13 + $0xc] sm:$0xf]
    %v302 = vunpack.c.l.b16 %v294
    %v303 = vunpack.c.l.b16 %v295
    %v304 = vunpack.c.l.b16 %v296
    %v305 = vunpack.c.l.b16 %v297
    %v306 = vpack.c.b16 %v303, %v302
    %v307 = vpack.c.b16 %v305, %v304
    %310 = vmatpush.bf16.msra.mxu0 0
    %311 = vmatpush.bf16.msra.mxu0 0
    %312 = vmatpush.bf16.msra.mxu0 0
    %313 = vmatpush.bf16.msra.mxu0 0
    %314 = vmatpush.bf16.msra.mxu0 0
    %315 = vmatpush.bf16.msra.mxu0 0
    %316 = vmatpush.bf16.msra.mxu0 %v307
    %317 = vmatpush.bf16.msra.mxu0 %v306
    %318 = vmatmul.bf16.gmra.mxu0 %v225
    %v319 = vpop.f32.mrf.mxu0
    %v320 = vadd.f32 0.0, %v319
    %v321 = vpop.f32.mrf.mxu0
    %v322 = vadd.f32 0.0, %v321
    %323 = vdwg.mxu0
    %v328 = vunpack.c.l.b16 %v290
    %v329 = vunpack.c.l.b16 %v291
    %v330 = vunpack.c.l.b16 %v292
    %v331 = vunpack.c.l.b16 %v293
    %v332 = vpack.c.b16 %v329, %v328
    %v333 = vpack.c.b16 %v331, %v330
    %v337 = vsel %vm194, %v289, 0
    %339 = vmatpush.bf16.msra.mxu0 0
    %340 = vmatpush.bf16.msra.mxu0 0
    %341 = vmatpush.bf16.msra.mxu0 0
    %342 = vmatpush.bf16.msra.mxu0 0
    %343 = vmatpush.bf16.msra.mxu0 0
    %344 = vmatpush.bf16.msra.mxu0 0
    %345 = vmatpush.bf16.msra.mxu0 %v333
    %346 = vmatpush.bf16.msra.mxu0 %v332
    %347 = vmatmul.bf16.gmra.mxu0 %v337
    %v348 = vpop.f32.mrf.mxu0
    %v349 = vadd.f32 %v320, %v348
    %v350 = vpop.f32.mrf.mxu0
    %v351 = vadd.f32 %v322, %v350
    %352 = vdwg.mxu0
    %v353 = vld [vmem:[%s9] sm:$0x1]
    %v355 = vperm.slane %v353, 0
    %v357 = vadd.f32 %v349, %v355
    %v358 = vadd.f32 %v351, %v355
    %v359 = vmax.f32 %v357, 0.0
    %v360 = vmax.f32 %v358, 0.0
    %v361 = vpack.c.bf16 %v360, %v359
    %v362 = vld [vmem:[#allocation14] sm:$0xf]
    %v363 = vld [vmem:[#allocation14 + $0x4] sm:$0xf]
    %v364 = vld [vmem:[#allocation14 + $0x8] sm:$0xf]
    %v365 = vld [vmem:[#allocation14 + $0xc] sm:$0xf]
    %v366 = vld [vmem:[#allocation14 + $0x10] sm:$0xf]
    %v367 = vld [vmem:[#allocation14 + $0x14] sm:$0xf]
    %v368 = vld [vmem:[#allocation14 + $0x18] sm:$0xf]
    %v369 = vld [vmem:[#allocation14 + $0x1c] sm:$0xf]
    %v370 = vld [vmem:[#allocation14 + $0x20] sm:$0xf]
    %v371 = vld [vmem:[#allocation14 + $0x24] sm:$0xf]
    %v372 = vld [vmem:[#allocation14 + $0x28] sm:$0xf]
    %v373 = vld [vmem:[#allocation14 + $0x2c] sm:$0xf]
    %v374 = vld [vmem:[#allocation14 + $0x30] sm:$0xf]
    %v375 = vld [vmem:[#allocation14 + $0x34] sm:$0xf]
    %v376 = vld [vmem:[#allocation14 + $0x38] sm:$0xf]
    %v377 = vld [vmem:[#allocation14 + $0x3c] sm:$0xf]
    %v378 = vld [vmem:[%s11] sm:$0x1]
    %v380 = vperm.slane %v378, 0
    %v398 = vunpack.c.l.b16 %v362
    %v399 = vunpack.c.l.b16 %v363
    %v400 = vunpack.c.l.b16 %v364
    %v401 = vunpack.c.l.b16 %v365
    %v402 = vunpack.c.l.b16 %v366
    %v403 = vunpack.c.l.b16 %v367
    %v404 = vunpack.c.l.b16 %v368
    %v405 = vunpack.c.l.b16 %v369
    %v406 = vunpack.c.l.b16 %v370
    %v407 = vunpack.c.l.b16 %v371
    %v408 = vunpack.c.l.b16 %v372
    %v409 = vunpack.c.l.b16 %v373
    %v410 = vunpack.c.l.b16 %v374
    %v411 = vunpack.c.l.b16 %v375
    %v412 = vunpack.c.l.b16 %v376
    %v413 = vunpack.c.l.b16 %v377
    %v414 = vpack.c.b16 %v399, %v398
    %v415 = vpack.c.b16 %v401, %v400
    %v416 = vpack.c.b16 %v403, %v402
    %v417 = vpack.c.b16 %v405, %v404
    %v418 = vpack.c.b16 %v407, %v406
    %v419 = vpack.c.b16 %v409, %v408
    %v420 = vpack.c.b16 %v411, %v410
    %v421 = vpack.c.b16 %v413, %v412
    %430 = vmatpush.bf16.msra.mxu0 %v421
    %431 = vmatpush.bf16.msra.mxu0 %v420
    %432 = vmatpush.bf16.msra.mxu0 %v419
    %433 = vmatpush.bf16.msra.mxu0 %v418
    %434 = vmatpush.bf16.msra.mxu0 %v417
    %435 = vmatpush.bf16.msra.mxu0 %v416
    %436 = vmatpush.bf16.msra.mxu0 %v415
    %437 = vmatpush.bf16.msra.mxu0 %v414
    %438 = vmatmul.bf16.gmra.mxu0 %v361
    %v439 = vpop.f32.mrf.mxu0
    %v440 = vadd.f32 %v380, %v439
    %v441 = vpop.f32.mrf.mxu0
    %v442 = vadd.f32 %v380, %v441
    %443 = vdwg.mxu0
    %444 = vst [vmem:[#allocation16] sm:$0xff] %v440
    %445 = vst [vmem:[#allocation16 + $0x8] sm:$0xff] %v442
    // Predicated region
    $region82: #{tpu_custom_call.1} parent=1 // pred_check
      _
    $region83: #{tpu_custom_call.1} parent=1 // pred_check_branch
      %447 = sbr.rel (0) target = $region85
    $region84: #{tpu_custom_call.1} parent=1 // pred_region
      %449 = vsyncadd [#allocation4], 0
      %s450 = sshll.u32 [#allocation16], 4
      %s451 = int_to_ptr.vmem [resolvable:$true] %s450
      %s452 = sshll.u32 %s12, 4
      %s453 = int_to_ptr.hbm [resolvable:$true] %s452
      %458 = dma.vmem_to_hbm [thread:$0]  %s451, 256, %s453, [#allocation4], 128, 128, 8
    $region85: #{tpu_custom_call.1} parent=1 // pred_fallthru
      _
    // Predicated region
    $region86: #{tpu_custom_call.1} parent=1 // pred_check
      _
    $region87: #{tpu_custom_call.1} parent=1 // pred_check_branch
      %460 = sbr.rel (0) target = $region89
    $region88: #{tpu_custom_call.1} parent=1 // pred_region
      %462 = dma.done [#allocation4], 256
    $region89: #{tpu_custom_call.1} parent=1 // pred_fallthru
      _
    %463 = vsyncpa [#allocation3], 1
    %464 = vsyncpa [#allocation6], 1
    %465 = vsyncpa [#allocation9], 1
    %466 = vsyncpa [#allocation12], 1
    %467 = vsyncpa [#allocation15], 1
    %468 = vsyncpa [#allocation4], 1

</llo_original>
